<compile_context>
chip_gen: v5e
topology: v5e:2x2
jax: 0.10.0
libtpu: 0.0.40
codegen_flags: <defaults>
</compile_context>

<pallas_src>
import functools
import math

import jax
import jax.numpy as jnp
from jax.experimental import pallas as pl
from jax.experimental.pallas import tpu as pltpu


def _model_kernel(w_ref, b_ref, u_ref, ud_ref, out_ref, *, K, N):
    """out = a[:, :N] * dropout(a @ W^T + b, p=0.5, training=True)

    a  = u + 2            (u ~ U[0,1), shape (M, K), VMEM)
    dropout keep-prob 0.5, kept values scaled by 2 (mask from ud ~ U[0,1))
    W (flattened, row-major) and b are scalars in SMEM; the contraction is an
    unrolled sum of K broadcast multiplies on the VPU (no MXU pass).
    """
    a = u_ref[...] + 2.0                                   # (M, K)  torch.rand_like(x1) + 2

    # Dropout mask with the 1/(1-p)=2 scale folded in: values in {0.0, 2.0}.
    drop_scale = jnp.where(ud_ref[...] >= 0.5, 2.0, 0.0)   # (M, N)

    # TODO(synk): reference does `a * dropout(linear(a))` with a:(..,4) vs
    # y:(..,2) — a PyTorch broadcast error; we multiply by a[:, :N] instead.
    a_scaled = a[:, :N] * drop_scale                       # (M, N)

    for j in range(N):
        # y[:, j] = b[j] + sum_k a[:, k] * W[j, k]   (unrolled VPU "matmul")
        col = a[:, 0:1] * w_ref[j * K + 0]
        for kk in range(1, K):
            col = col + a[:, kk:kk + 1] * w_ref[j * K + kk]
        col = col + b_ref[j]
        # Final F.dropout(x2, p=0.5, training=False) is the identity.
        out_ref[:, j:j + 1] = a_scaled[:, j:j + 1] * col


def model_forward(x1, weight, bias, rng_key):
    """x1: (B, S, K) float32 (only shape/dtype used, like rand_like).
    weight: (N, K) as in nn.Linear; bias: (N,).  Returns (B, S, N) float32."""
    B, S, K = x1.shape
    N = weight.shape[0]
    M = B * S

    # Host-side random draws (see module docstring for why not pltpu.prng_*).
    k_a, k_d = jax.random.split(rng_key)
    u = jax.random.uniform(k_a, (M, K), dtype=jnp.float32)       # -> a = u + 2
    u_drop = jax.random.uniform(k_d, (M, N), dtype=jnp.float32)  # dropout draw

    w_flat = weight.astype(jnp.float32).reshape(-1)              # (N*K,), w_flat[j*K+k] = W[j,k]
    b = bias.astype(jnp.float32)                                 # (N,)

    kernel = functools.partial(_model_kernel, K=K, N=N)

    out = pl.pallas_call(
        kernel,
        out_shape=jax.ShapeDtypeStruct((M, N), jnp.float32),
        in_specs=[
            pl.BlockSpec(memory_space=pltpu.MemorySpace.SMEM),   # W scalars
            pl.BlockSpec(memory_space=pltpu.MemorySpace.SMEM),   # bias scalars
            pl.BlockSpec(memory_space=pltpu.MemorySpace.VMEM),   # u      (M, K)
            pl.BlockSpec(memory_space=pltpu.MemorySpace.VMEM),   # u_drop (M, N)
        ],
        out_specs=pl.BlockSpec(memory_space=pltpu.MemorySpace.VMEM),
    )(w_flat, b, u, u_drop)

    return out.reshape(B, S, N)


if __name__ == "__main__":
    key = jax.random.PRNGKey(0)
    k_x, k_w, k_b = jax.random.split(key, 3)

    # Shapes implied by the module: x1 = torch.randn(1, 2, 4), Linear(4, 2).
    B, S, K, N = 1, 2, 4, 2
    x1 = jax.random.normal(k_x, (B, S, K), dtype=jnp.float32)

    # Deterministic nn.Linear-style init: U(-1/sqrt(K), 1/sqrt(K)).
    bound = 1.0 / math.sqrt(K)
    weight = jax.random.uniform(k_w, (N, K), jnp.float32, -bound, bound)
    bias = jax.random.uniform(k_b, (N,), jnp.float32, -bound, bound)

    rng = jax.random.PRNGKey(1234)
    out = jax.block_until_ready(model_forward(x1, weight, bias, rng))

    # Pure-JAX reference using the same host-side random draws.
    k_a, k_d = jax.random.split(rng)
    u = jax.random.uniform(k_a, (B * S, K), dtype=jnp.float32)
    u_drop = jax.random.uniform(k_d, (B * S, N), dtype=jnp.float32)
    a = u + 2.0
    y = a @ weight.T.astype(jnp.float32) + bias
    scale = jnp.where(u_drop >= 0.5, 2.0, 0.0)
    ref = (a[:, :N] * (y * scale)).reshape(B, S, N)

    assert out.shape == (B, S, N), out.shape
    assert out.dtype == jnp.float32, out.dtype
    assert bool(jnp.all(jnp.isfinite(out)))
    assert bool(jnp.allclose(out, ref, rtol=1e-5, atol=1e-5))
    print("KERNEL_OK")
</pallas_src>

<mosaic_0001>
module attributes {stable_mosaic.version = 11 : i64} {
  func.func @_model_kernel(%arg0: memref<8xf32, #tpu.memory_space<smem>>, %arg1: memref<2xf32, #tpu.memory_space<smem>>, %arg2: memref<2x4xf32, #tpu.memory_space<vmem>>, %arg3: memref<2x2xf32, #tpu.memory_space<vmem>>, %arg4: memref<2x2xf32, #tpu.memory_space<vmem>>) attributes {dimension_semantics = [], scalar_prefetch = 0 : i64, scratch_operands = 0 : i64, tpu.core_type = #tpu.core_type<tc>} {
    %c0 = arith.constant 0 : index
    %c0_0 = arith.constant 0 : index
    %0 = vector.load %arg2[%c0, %c0_0] : memref<2x4xf32, #tpu.memory_space<vmem>>, vector<2x4xf32>
    %cst = arith.constant 2.000000e+00 : f32
    %1 = vector.broadcast %cst : f32 to vector<2x4xf32>
    %2 = arith.addf %0, %1 : vector<2x4xf32>
    %c0_1 = arith.constant 0 : index
    %c0_2 = arith.constant 0 : index
    %3 = vector.load %arg3[%c0_1, %c0_2] : memref<2x2xf32, #tpu.memory_space<vmem>>, vector<2x2xf32>
    %cst_3 = arith.constant 5.000000e-01 : f32
    %4 = vector.broadcast %cst_3 : f32 to vector<2x2xf32>
    %5 = arith.cmpf oge, %3, %4 : vector<2x2xf32>
    %cst_4 = arith.constant 2.000000e+00 : f32
    %cst_5 = arith.constant 0.000000e+00 : f32
    %6 = vector.broadcast %cst_4 : f32 to vector<2x2xf32>
    %7 = vector.broadcast %cst_5 : f32 to vector<2x2xf32>
    %8 = arith.select %5, %6, %7 : vector<2x2xi1>, vector<2x2xf32>
    %9 = vector.extract_strided_slice %2 {offsets = [0, 0], sizes = [2, 2], strides = [1, 1]} : vector<2x4xf32> to vector<2x2xf32>
    %10 = arith.mulf %9, %8 : vector<2x2xf32>
    %11 = vector.extract_strided_slice %2 {offsets = [0, 0], sizes = [2, 1], strides = [1, 1]} : vector<2x4xf32> to vector<2x1xf32>
    %c0_6 = arith.constant 0 : index
    %12 = memref.load %arg0[%c0_6] : memref<8xf32, #tpu.memory_space<smem>>
    %13 = vector.broadcast %12 : f32 to vector<2x1xf32>
    %14 = arith.mulf %11, %13 : vector<2x1xf32>
    %15 = vector.extract_strided_slice %2 {offsets = [0, 1], sizes = [2, 1], strides = [1, 1]} : vector<2x4xf32> to vector<2x1xf32>
    %c1 = arith.constant 1 : index
    %16 = memref.load %arg0[%c1] : memref<8xf32, #tpu.memory_space<smem>>
    %17 = vector.broadcast %16 : f32 to vector<2x1xf32>
    %18 = arith.mulf %15, %17 : vector<2x1xf32>
    %19 = arith.addf %14, %18 : vector<2x1xf32>
    %20 = vector.extract_strided_slice %2 {offsets = [0, 2], sizes = [2, 1], strides = [1, 1]} : vector<2x4xf32> to vector<2x1xf32>
    %c2 = arith.constant 2 : index
    %21 = memref.load %arg0[%c2] : memref<8xf32, #tpu.memory_space<smem>>
    %22 = vector.broadcast %21 : f32 to vector<2x1xf32>
    %23 = arith.mulf %20, %22 : vector<2x1xf32>
    %24 = arith.addf %19, %23 : vector<2x1xf32>
    %25 = vector.extract_strided_slice %2 {offsets = [0, 3], sizes = [2, 1], strides = [1, 1]} : vector<2x4xf32> to vector<2x1xf32>
    %c3 = arith.constant 3 : index
    %26 = memref.load %arg0[%c3] : memref<8xf32, #tpu.memory_space<smem>>
    %27 = vector.broadcast %26 : f32 to vector<2x1xf32>
    %28 = arith.mulf %25, %27 : vector<2x1xf32>
    %29 = arith.addf %24, %28 : vector<2x1xf32>
    %c0_7 = arith.constant 0 : index
    %30 = memref.load %arg1[%c0_7] : memref<2xf32, #tpu.memory_space<smem>>
    %31 = vector.broadcast %30 : f32 to vector<2x1xf32>
    %32 = arith.addf %29, %31 : vector<2x1xf32>
    %33 = vector.extract_strided_slice %10 {offsets = [0, 0], sizes = [2, 1], strides = [1, 1]} : vector<2x2xf32> to vector<2x1xf32>
    %34 = arith.mulf %33, %32 : vector<2x1xf32>
    %c0_8 = arith.constant 0 : index
    %c0_9 = arith.constant 0 : index
    %35 = vector.load %arg4[%c0_8, %c0_9] : memref<2x2xf32, #tpu.memory_space<vmem>>, vector<2x1xf32>
    tpu.vector_store %arg4[%c0_8, %c0_9], %34 {strides = array<i32>} : memref<2x2xf32, #tpu.memory_space<vmem>>, vector<2x1xf32>,
    %36 = vector.extract_strided_slice %2 {offsets = [0, 0], sizes = [2, 1], strides = [1, 1]} : vector<2x4xf32> to vector<2x1xf32>
    %c4 = arith.constant 4 : index
    %37 = memref.load %arg0[%c4] : memref<8xf32, #tpu.memory_space<smem>>
    %38 = vector.broadcast %37 : f32 to vector<2x1xf32>
    %39 = arith.mulf %36, %38 : vector<2x1xf32>
    %40 = vector.extract_strided_slice %2 {offsets = [0, 1], sizes = [2, 1], strides = [1, 1]} : vector<2x4xf32> to vector<2x1xf32>
    %c5 = arith.constant 5 : index
    %41 = memref.load %arg0[%c5] : memref<8xf32, #tpu.memory_space<smem>>
    %42 = vector.broadcast %41 : f32 to vector<2x1xf32>
    %43 = arith.mulf %40, %42 : vector<2x1xf32>
    %44 = arith.addf %39, %43 : vector<2x1xf32>
    %45 = vector.extract_strided_slice %2 {offsets = [0, 2], sizes = [2, 1], strides = [1, 1]} : vector<2x4xf32> to vector<2x1xf32>
    %c6 = arith.constant 6 : index
    %46 = memref.load %arg0[%c6] : memref<8xf32, #tpu.memory_space<smem>>
    %47 = vector.broadcast %46 : f32 to vector<2x1xf32>
    %48 = arith.mulf %45, %47 : vector<2x1xf32>
    %49 = arith.addf %44, %48 : vector<2x1xf32>
    %50 = vector.extract_strided_slice %2 {offsets = [0, 3], sizes = [2, 1], strides = [1, 1]} : vector<2x4xf32> to vector<2x1xf32>
    %c7 = arith.constant 7 : index
    %51 = memref.load %arg0[%c7] : memref<8xf32, #tpu.memory_space<smem>>
    %52 = vector.broadcast %51 : f32 to vector<2x1xf32>
    %53 = arith.mulf %50, %52 : vector<2x1xf32>
    %54 = arith.addf %49, %53 : vector<2x1xf32>
    %c1_10 = arith.constant 1 : index
    %55 = memref.load %arg1[%c1_10] : memref<2xf32, #tpu.memory_space<smem>>
    %56 = vector.broadcast %55 : f32 to vector<2x1xf32>
    %57 = arith.addf %54, %56 : vector<2x1xf32>
    %58 = vector.extract_strided_slice %10 {offsets = [0, 1], sizes = [2, 1], strides = [1, 1]} : vector<2x2xf32> to vector<2x1xf32>
    %59 = arith.mulf %58, %57 : vector<2x1xf32>
    %c0_11 = arith.constant 0 : index
    %c1_12 = arith.constant 1 : index
    %60 = vector.load %arg4[%c0_11, %c1_12] : memref<2x2xf32, #tpu.memory_space<vmem>>, vector<2x1xf32>
    tpu.vector_store %arg4[%c0_11, %c1_12], %59 {strides = array<i32>} : memref<2x2xf32, #tpu.memory_space<vmem>>, vector<2x1xf32>,
    return
  }
}

</mosaic_0001>

<llo_original>
// kernel: tpu_custom_call.1
$region0: #{tpu_custom_call.1}
  #allocation0 [shape = 'u32[]', space=smem, size = 0x4, offset = 0x4, fixed_abs, tag = 'smem constant byte address 0x4 - core index']
  #allocation1 [shape = 'u32[72,128]{1,0:T(1,128)}', space=vmem, size = 0x9000, scoped, tag = 'internal scratch']
  %s0 = inlined_call_operand.hbm [shape: f32[8], index: 0, kind: input, shape index: {}]
  %s1 = inlined_call_operand.hbm [shape: f32[2], index: 1, kind: input, shape index: {}]
  %s2 = inlined_call_operand.hbm [shape: f32[2,4], index: 2, kind: input, shape index: {}]
  %s3 = inlined_call_operand.vmem [shape: f32[2,2], index: 3, kind: input, shape index: {}]
  %s4 = inlined_call_operand.hbm [shape: f32[2,2], index: 4, kind: output, shape index: {}]
  %s5 = sld [smem:[#allocation0]]
  $region38: #{tpu_custom_call.1} parent=0
    _
  %s7 = ssub.s32 1, %s5
  %s8 = scalar_select 0, %s7, %s5
  $region1: #{tpu_custom_call.1} parent=0
    #allocation2 [shape = 'u8[512]{0}', space=smem, size = 0x200, scoped, tag = 'input window, operand 0, single buffered']
    #allocation3 [shape = 's32[1]{0}', space=sflag, size = 0x4, scoped, tag = 'scoped memory for tpu_custom_call.1']
    #allocation4 [shape = 's32[1]{0}', space=sflag, size = 0x4, scoped, tag = 'scoped memory for tpu_custom_call.1']
    #allocation5 [shape = 's32[1]{0}', space=sflag, size = 0x4, scoped, tag = 'scoped memory for tpu_custom_call.1']
    #allocation6 [shape = 'u8[512]{0}', space=smem, size = 0x200, scoped, tag = 'input window, operand 1, single buffered']
    #allocation7 [shape = 's32[1]{0}', space=sflag, size = 0x4, scoped, tag = 'scoped memory for tpu_custom_call.1']
    #allocation8 [shape = 'u8[1024]{0}', space=vmem, size = 0x400, scoped, tag = 'input window, operand 2, single buffered']
    #allocation9 [shape = 'u8[1024]{0}', space=vmem, size = 0x400, scoped, tag = 'output window, operand 0, single buffered']
    %9 = vsyncpa [#allocation5], 0
    %10 = vsyncpa [#allocation7], 0
    %11 = vsyncpa [#allocation3], 0
    %12 = vsyncpa [#allocation4], 0
    // Predicated region
    $region2: #{tpu_custom_call.1} parent=1 // pred_check
      _
    $region3: #{tpu_custom_call.1} parent=1 // pred_check_branch
      %14 = sbr.rel (0) target = $region5
    $region4: #{tpu_custom_call.1} parent=1 // pred_region
      %16 = vsyncadd [#allocation5], 0
      %s18 = sshll.u32 %s0, 4
      %s19 = int_to_ptr.hbm [resolvable:$true] %s18
      %21 = dma.hbm_to_smem %s19, 16, [#allocation2], [#allocation5]
    $region5: #{tpu_custom_call.1} parent=1 // pred_fallthru
      _
    // Predicated region
    $region6: #{tpu_custom_call.1} parent=1 // pred_check
      _
    $region7: #{tpu_custom_call.1} parent=1 // pred_check_branch
      %23 = sbr.rel (0) target = $region9
    $region8: #{tpu_custom_call.1} parent=1 // pred_region
      %25 = vsyncadd [#allocation7], 0
      %s27 = sshll.u32 %s1, 4
      %s28 = int_to_ptr.hbm [resolvable:$true] %s27
      %30 = dma.hbm_to_smem %s28, 16, [#allocation6], [#allocation7]
    $region9: #{tpu_custom_call.1} parent=1 // pred_fallthru
      _
    // Predicated region
    $region10: #{tpu_custom_call.1} parent=1 // pred_check
      _
    $region11: #{tpu_custom_call.1} parent=1 // pred_check_branch
      %32 = sbr.rel (0) target = $region13
    $region12: #{tpu_custom_call.1} parent=1 // pred_region
      %34 = vsyncadd [#allocation3], 0
      %s36 = sshll.u32 %s2, 4
      %s37 = int_to_ptr.hbm [resolvable:$true] %s36
      %s38 = sshll.u32 [#allocation8], 4
      %s39 = int_to_ptr.vmem [resolvable:$true] %s38
      %41 = dma.hbm_to_vmem [thread:$0]  %s37, 32, %s39, [#allocation3]
    $region13: #{tpu_custom_call.1} parent=1 // pred_fallthru
      _
    // Predicated region
    $region14: #{tpu_custom_call.1} parent=1 // pred_check
      _
    $region15: #{tpu_custom_call.1} parent=1 // pred_check_branch
      %43 = sbr.rel (0) target = $region17
    $region16: #{tpu_custom_call.1} parent=1 // pred_region
      _
    $region17: #{tpu_custom_call.1} parent=1 // pred_fallthru
      _
    // Predicated region
    $region18: #{tpu_custom_call.1} parent=1 // pred_check
      _
    $region19: #{tpu_custom_call.1} parent=1 // pred_check_branch
      %45 = sbr.rel (0) target = $region21
    $region20: #{tpu_custom_call.1} parent=1 // pred_region
      %47 = dma.done [#allocation5], 16
    $region21: #{tpu_custom_call.1} parent=1 // pred_fallthru
      _
    // Predicated region
    $region22: #{tpu_custom_call.1} parent=1 // pred_check
      _
    $region23: #{tpu_custom_call.1} parent=1 // pred_check_branch
      %49 = sbr.rel (0) target = $region25
    $region24: #{tpu_custom_call.1} parent=1 // pred_region
      %51 = dma.done [#allocation7], 16
    $region25: #{tpu_custom_call.1} parent=1 // pred_fallthru
      _
    // Predicated region
    $region26: #{tpu_custom_call.1} parent=1 // pred_check
      _
    $region27: #{tpu_custom_call.1} parent=1 // pred_check_branch
      %53 = sbr.rel (0) target = $region29
    $region28: #{tpu_custom_call.1} parent=1 // pred_region
      %55 = dma.done [#allocation3], 32
    $region29: #{tpu_custom_call.1} parent=1 // pred_fallthru
      _
    %56 = sfence
    %v57 = vld [vmem:[#allocation8] sm:$0x3]
    %v58 = vadd.f32 %v57, 2.0
    %v59 = vld [vmem:[%s3] sm:$0x3]
    %vm60 = vcmp.ge.f32.partialorder %v59, 0.5
    %v61 = vsel %vm60, 2.0, 0.0
    %v62 = vmul.f32 %v58, %v61
    %s63 = sld [smem:[#allocation2]]
    %v64 = vstv %s63
    %v65 = vmul.f32 %v58, %v64
    %s66 = sld [smem:[#allocation2 + $0x1]]
    %v67 = vstv %s66
    %v68 = vmul.f32 %v58, %v67
    %70 = vrot.lane.b32.xlu0 %v68, 127
    %v71 = vpop.permute.xlu0 %70
    %v73 = vadd.f32 %v65, %v71
    %s74 = sld [smem:[#allocation2 + $0x2]]
    %v75 = vstv %s74
    %v76 = vmul.f32 %v58, %v75
    %78 = vrot.lane.b32.xlu0 %v76, 126
    %v79 = vpop.permute.xlu0 %78
    %v81 = vadd.f32 %v73, %v79
    %s82 = sld [smem:[#allocation2 + $0x3]]
    %v83 = vstv %s82
    %v84 = vmul.f32 %v58, %v83
    %86 = vrot.lane.b32.xlu0 %v84, 125
    %v87 = vpop.permute.xlu0 %86
    %v89 = vadd.f32 %v81, %v87
    %s90 = sld [smem:[#allocation6]]
    %v91 = vstv %s90
    %v92 = vadd.f32 %v89, %v91
    %v93 = vmul.f32 %v62, %v92
    %vm94 = vcmask 1024
    %95 = vst.msk [vmem:[#allocation9] sm:$0x3] %vm94, %v93
    %s96 = sld [smem:[#allocation2 + $0x4]]
    %v97 = vstv %s96
    %v98 = vmul.f32 %v58, %v97
    %s99 = sld [smem:[#allocation2 + $0x5]]
    %v100 = vstv %s99
    %v101 = vmul.f32 %v58, %v100
    %103 = vrot.lane.b32.xlu0 %v101, 127
    %v104 = vpop.permute.xlu0 %103
    %v106 = vadd.f32 %v98, %v104
    %s107 = sld [smem:[#allocation2 + $0x6]]
    %v108 = vstv %s107
    %v109 = vmul.f32 %v58, %v108
    %111 = vrot.lane.b32.xlu0 %v109, 126
    %v112 = vpop.permute.xlu0 %111
    %v114 = vadd.f32 %v106, %v112
    %s115 = sld [smem:[#allocation2 + $0x7]]
    %v116 = vstv %s115
    %v117 = vmul.f32 %v58, %v116
    %119 = vrot.lane.b32.xlu0 %v117, 125
    %v120 = vpop.permute.xlu0 %119
    %v122 = vadd.f32 %v114, %v120
    %s123 = sld [smem:[#allocation6 + $0x1]]
    %v124 = vstv %s123
    %v125 = vadd.f32 %v122, %v124
    %127 = vrot.lane.b32.xlu0 %v125, 1
    %v128 = vpop.permute.xlu0 %127
    %v130 = vmul.f32 %v62, %v128
    %vm131 = vcmask 9224
    %132 = vst.msk [vmem:[#allocation9] sm:$0x3] %vm131, %v130
    // Predicated region
    $region30: #{tpu_custom_call.1} parent=1 // pred_check
      _
    $region31: #{tpu_custom_call.1} parent=1 // pred_check_branch
      %134 = sbr.rel (0) target = $region33
    $region32: #{tpu_custom_call.1} parent=1 // pred_region
      %136 = vsyncadd [#allocation4], 0
      %s138 = sshll.u32 [#allocation9], 4
      %s139 = int_to_ptr.vmem [resolvable:$true] %s138
      %s140 = sshll.u32 %s4, 4
      %s141 = int_to_ptr.hbm [resolvable:$true] %s140
      %143 = dma.vmem_to_hbm [thread:$0]  %s139, 32, %s141, [#allocation4]
    $region33: #{tpu_custom_call.1} parent=1 // pred_fallthru
      _
    // Predicated region
    $region34: #{tpu_custom_call.1} parent=1 // pred_check
      _
    $region35: #{tpu_custom_call.1} parent=1 // pred_check_branch
      %145 = sbr.rel (0) target = $region37
    $region36: #{tpu_custom_call.1} parent=1 // pred_region
      %147 = dma.done [#allocation4], 32
    $region37: #{tpu_custom_call.1} parent=1 // pred_fallthru
      _
    %148 = vsyncpa [#allocation3], 1
    %149 = vsyncpa [#allocation4], 1
    %150 = vsyncpa [#allocation5], 1
    %151 = vsyncpa [#allocation7], 1

</llo_original>
